<compile_context>
chip_gen: v6e
topology: v6e:2x2x1
jax: 0.10.0
libtpu: 0.0.40
codegen_flags: <defaults>
</compile_context>

<pallas_src>
import functools

import jax
import jax.numpy as jnp
from jax.experimental import pallas as pl
from jax.experimental.pallas import tpu as pltpu


def _pick_batch_tile(batch, row_bytes, max_block_bytes=4 << 20):
    """Largest batch tile whose (tb, C, L) slab stays under max_block_bytes.

    Prefers a divisor of `batch` so the grid has no ragged (masked) tail.
    """
    cap = max(1, min(batch, max_block_bytes // max(row_bytes, 1)))
    for tb in range(cap, 0, -1):
        if batch % tb == 0:
            return tb
    return 1


def _se_fused_kernel(x_ref, w1t_ref, b1_ref, w2t_ref, b2_ref, o_ref, *, inv_l):
    """Fused SE block on one (TB, C, L) slab resident in VMEM."""
    x = x_ref[...]                                              # (TB, C, L) native dtype

    # Global average pool over the spatial (lane) axis, accumulated in f32.
    pooled = jnp.sum(x.astype(jnp.float32), axis=-1) * inv_l    # (TB, C)

    # Tiny FCs on the MXU (weights pre-transposed in the wrapper).
    h = jnp.dot(pooled, w1t_ref[...],
                preferred_element_type=jnp.float32,
                precision=jax.lax.Precision.HIGHEST) + b1_ref[...]
    h = jnp.maximum(h, 0.0)                                     # (TB, Hid)
    g = jnp.dot(h, w2t_ref[...],
                preferred_element_type=jnp.float32,
                precision=jax.lax.Precision.HIGHEST) + b2_ref[...]
    g = jnp.clip(g + 3.0, 0.0, 6.0) * (1.0 / 6.0)               # h_sigmoid, (TB, C)

    # Channel-wise rescale in the input dtype (gate broadcast over lanes).
    o_ref[...] = (x * g.astype(x.dtype)[:, :, None]).astype(o_ref.dtype)


def squeeze_block(x, w1, b1, w2, b2):
    """SqueezeBlock forward.

    x: (B, C, H, W); w1: (Hid, C); b1: (Hid,); w2: (C, Hid); b2: (C,)
    """
    B, C, H, W = x.shape
    hid = w1.shape[0]
    L = H * W
    x3 = x.reshape(B, C, L)                       # lane-dense view (lanes = H*W)

    # Pre-transposed f32 weights -> plain row-major MXU dots in the kernel.
    w1_t = jnp.asarray(w1, jnp.float32).T         # (C, Hid)
    w2_t = jnp.asarray(w2, jnp.float32).T         # (Hid, C)
    b1_2d = jnp.asarray(b1, jnp.float32).reshape(1, hid)
    b2_2d = jnp.asarray(b2, jnp.float32).reshape(1, C)

    itemsize = x.dtype.itemsize
    row_bytes = C * L * itemsize
    tb = _pick_batch_tile(B, row_bytes)
    n_blocks = pl.cdiv(B, tb)

    # VMEM budget: double-buffered input + output blocks + resident weights.
    block_bytes = tb * row_bytes
    weight_bytes = 4 * (w1_t.size + w2_t.size + b1_2d.size + b2_2d.size)
    vmem_need = 4 * block_bytes + 2 * weight_bytes + (1 << 20)
    vmem_limit = int(min(max(vmem_need, 32 << 20), 48 << 20))   # safe on v5e/v6e/v7x

    out3 = pl.pallas_call(
        functools.partial(_se_fused_kernel, inv_l=1.0 / L),
        out_shape=jax.ShapeDtypeStruct((B, C, L), x.dtype),
        grid=(n_blocks,),
        in_specs=[
            pl.BlockSpec((tb, C, L), lambda b: (b, 0, 0)),   # x slab (full C, full L)
            pl.BlockSpec((C, hid), lambda b: (0, 0)),        # W1^T (resident)
            pl.BlockSpec((1, hid), lambda b: (0, 0)),        # b1
            pl.BlockSpec((hid, C), lambda b: (0, 0)),        # W2^T (resident)
            pl.BlockSpec((1, C), lambda b: (0, 0)),          # b2
        ],
        out_specs=pl.BlockSpec((tb, C, L), lambda b: (b, 0, 0)),
        compiler_params=pltpu.CompilerParams(
            dimension_semantics=("parallel",),   # independent batch blocks -> v7x's 2 TCs split them
            vmem_limit_bytes=vmem_limit,
        ),
    )(x3, w1_t, b1_2d, w2_t, b2_2d)

    return out3.reshape(B, C, H, W)


if __name__ == "__main__":
    key = jax.random.PRNGKey(0)
    kx, k1, k2, k3, k4 = jax.random.split(key, 5)

    B, C, H, W = 2, 16, 16, 16
    divide = 4
    hid = max(1, C // divide)

    x = jax.random.normal(kx, (B, C, H, W), dtype=jnp.float32) * 2.0
    w1 = jax.random.normal(k1, (hid, C), dtype=jnp.float32) * 0.5
    b1 = jax.random.normal(k2, (hid,), dtype=jnp.float32) * 0.1
    w2 = jax.random.normal(k3, (C, hid), dtype=jnp.float32) * 0.5
    b2 = jax.random.normal(k4, (C,), dtype=jnp.float32) * 0.1

    out = squeeze_block(x, w1, b1, w2, b2)
    jax.block_until_ready(out)

    # Pure-JAX reference (same math as PyTorch SqueezeBlock.forward).
    hi = jax.lax.Precision.HIGHEST
    pooled = jnp.mean(x, axis=(2, 3))                                         # avg_pool2d + view
    h = jnp.maximum(jnp.dot(pooled, w1.T, precision=hi) + b1, 0.0)            # Linear + ReLU
    g = jnp.clip(jnp.dot(h, w2.T, precision=hi) + b2 + 3.0, 0.0, 6.0) / 6.0   # Linear + h_sigmoid
    ref = x * g[:, :, None, None]                                             # channel-wise rescale

    assert out.shape == x.shape and out.dtype == x.dtype
    err = float(jnp.max(jnp.abs(out - ref)))
    assert jnp.allclose(out, ref, atol=1e-4, rtol=1e-4), err
    print("KERNEL_OK")
</pallas_src>

<mosaic_0001>
module attributes {stable_mosaic.version = 11 : i64} {
  func.func @_se_fused_kernel(%arg0: i32, %arg1: memref<2x16x256xf32, #tpu.memory_space<vmem>>, %arg2: memref<16x4xf32, #tpu.memory_space<vmem>>, %arg3: memref<1x4xf32, #tpu.memory_space<vmem>>, %arg4: memref<4x16xf32, #tpu.memory_space<vmem>>, %arg5: memref<1x16xf32, #tpu.memory_space<vmem>>, %arg6: memref<2x16x256xf32, #tpu.memory_space<vmem>>) attributes {dimension_semantics = [#tpu.dimension_semantics<parallel>], iteration_bounds = array<i64: 1>, scalar_prefetch = 0 : i64, scratch_operands = 0 : i64, tpu.core_type = #tpu.core_type<tc>, window_params = [{transform_indices = @transform_0, window_bounds = array<i64: 2, 16, 256>}, {pipeline_mode = #tpu.pipeline_mode<synchronous>, transform_indices = @transform_1, window_bounds = array<i64: 16, 4>}, {pipeline_mode = #tpu.pipeline_mode<synchronous>, transform_indices = @transform_2, window_bounds = array<i64: 1, 4>}, {pipeline_mode = #tpu.pipeline_mode<synchronous>, transform_indices = @transform_3, window_bounds = array<i64: 4, 16>}, {pipeline_mode = #tpu.pipeline_mode<synchronous>, transform_indices = @transform_4, window_bounds = array<i64: 1, 16>}, {transform_indices = @transform_5, window_bounds = array<i64: 2, 16, 256>}]} {
    %c0 = arith.constant 0 : index
    %c0_0 = arith.constant 0 : index
    %c0_1 = arith.constant 0 : index
    %0 = vector.load %arg1[%c0, %c0_0, %c0_1] : memref<2x16x256xf32, #tpu.memory_space<vmem>>, vector<2x16x256xf32>
    %cst = arith.constant dense<0.000000e+00> : vector<2x16xf32>
    %1 = vector.multi_reduction <add>, %0, %cst [2] : vector<2x16x256xf32> to vector<2x16xf32>
    %cst_2 = arith.constant 3.906250e-03 : f32
    %2 = vector.broadcast %cst_2 : f32 to vector<2x16xf32>
    %3 = arith.mulf %1, %2 : vector<2x16xf32>
    %c0_3 = arith.constant 0 : index
    %c0_4 = arith.constant 0 : index
    %4 = vector.load %arg2[%c0_3, %c0_4] : memref<16x4xf32, #tpu.memory_space<vmem>>, vector<16x4xf32>
    %cst_5 = arith.constant dense<0.000000e+00> : vector<2x4xf32>
    %5 = tpu.matmul %3, %4, %cst_5 {dimension_numbers = #tpu.dot_dimension_numbers<[1], [0], [0], [1], [0, 0, 1, 1], [], []>, precision = #tpu.contract_precision<fp32>} : vector<2x16xf32>, vector<16x4xf32>, vector<2x4xf32> -> vector<2x4xf32>
    %c0_6 = arith.constant 0 : index
    %c0_7 = arith.constant 0 : index
    %6 = vector.load %arg3[%c0_6, %c0_7] : memref<1x4xf32, #tpu.memory_space<vmem>>, vector<1x4xf32>
    %7 = vector.broadcast %6 : vector<1x4xf32> to vector<2x4xf32>
    %8 = arith.addf %5, %7 : vector<2x4xf32>
    %cst_8 = arith.constant 0.000000e+00 : f32
    %9 = vector.broadcast %cst_8 : f32 to vector<2x4xf32>
    %10 = arith.maximumf %8, %9 : vector<2x4xf32>
    %c0_9 = arith.constant 0 : index
    %c0_10 = arith.constant 0 : index
    %11 = vector.load %arg4[%c0_9, %c0_10] : memref<4x16xf32, #tpu.memory_space<vmem>>, vector<4x16xf32>
    %cst_11 = arith.constant dense<0.000000e+00> : vector<2x16xf32>
    %12 = tpu.matmul %10, %11, %cst_11 {dimension_numbers = #tpu.dot_dimension_numbers<[1], [0], [0], [1], [0, 0, 1, 1], [], []>, precision = #tpu.contract_precision<fp32>} : vector<2x4xf32>, vector<4x16xf32>, vector<2x16xf32> -> vector<2x16xf32>
    %c0_12 = arith.constant 0 : index
    %c0_13 = arith.constant 0 : index
    %13 = vector.load %arg5[%c0_12, %c0_13] : memref<1x16xf32, #tpu.memory_space<vmem>>, vector<1x16xf32>
    %14 = vector.broadcast %13 : vector<1x16xf32> to vector<2x16xf32>
    %15 = arith.addf %12, %14 : vector<2x16xf32>
    %cst_14 = arith.constant 3.000000e+00 : f32
    %16 = vector.broadcast %cst_14 : f32 to vector<2x16xf32>
    %17 = arith.addf %15, %16 : vector<2x16xf32>
    %cst_15 = arith.constant 0.000000e+00 : f32
    %cst_16 = arith.constant 6.000000e+00 : f32
    %18 = vector.broadcast %cst_15 : f32 to vector<2x16xf32>
    %19 = arith.maximumf %18, %17 : vector<2x16xf32>
    %20 = vector.broadcast %cst_16 : f32 to vector<2x16xf32>
    %21 = arith.minimumf %20, %19 : vector<2x16xf32>
    %cst_17 = arith.constant 0.166666672 : f32
    %22 = vector.broadcast %cst_17 : f32 to vector<2x16xf32>
    %23 = arith.mulf %21, %22 : vector<2x16xf32>
    %24 = vector.shape_cast %23 : vector<2x16xf32> to vector<2x16x1xf32>
    %25 = vector.broadcast %24 : vector<2x16x1xf32> to vector<2x16x256xf32>
    %26 = arith.mulf %0, %25 : vector<2x16x256xf32>
    %c0_18 = arith.constant 0 : index
    %c0_19 = arith.constant 0 : index
    %c0_20 = arith.constant 0 : index
    %27 = vector.load %arg6[%c0_18, %c0_19, %c0_20] : memref<2x16x256xf32, #tpu.memory_space<vmem>>, vector<2x16x256xf32>
    tpu.vector_store %arg6[%c0_18, %c0_19, %c0_20], %26 {strides = array<i32>} : memref<2x16x256xf32, #tpu.memory_space<vmem>>, vector<2x16x256xf32>,
    return
  }
  func.func @transform_0(%arg0: i32) -> (i32, i32, i32) {
    %c0_i32 = arith.constant 0 : i32
    %c0_i32_0 = arith.constant 0 : i32
    %c0_i32_1 = arith.constant 0 : i32
    return %arg0, %c0_i32, %c0_i32_0 : i32, i32, i32
  }
  func.func @transform_1(%arg0: i32) -> (i32, i32) {
    %c0_i32 = arith.constant 0 : i32
    %c0_i32_0 = arith.constant 0 : i32
    %c0_i32_1 = arith.constant 0 : i32
    return %c0_i32, %c0_i32_0 : i32, i32
  }
  func.func @transform_2(%arg0: i32) -> (i32, i32) {
    %c0_i32 = arith.constant 0 : i32
    %c0_i32_0 = arith.constant 0 : i32
    %c0_i32_1 = arith.constant 0 : i32
    return %c0_i32, %c0_i32_0 : i32, i32
  }
  func.func @transform_3(%arg0: i32) -> (i32, i32) {
    %c0_i32 = arith.constant 0 : i32
    %c0_i32_0 = arith.constant 0 : i32
    %c0_i32_1 = arith.constant 0 : i32
    return %c0_i32, %c0_i32_0 : i32, i32
  }
  func.func @transform_4(%arg0: i32) -> (i32, i32) {
    %c0_i32 = arith.constant 0 : i32
    %c0_i32_0 = arith.constant 0 : i32
    %c0_i32_1 = arith.constant 0 : i32
    return %c0_i32, %c0_i32_0 : i32, i32
  }
  func.func @transform_5(%arg0: i32) -> (i32, i32, i32) {
    %c0_i32 = arith.constant 0 : i32
    %c0_i32_0 = arith.constant 0 : i32
    %c0_i32_1 = arith.constant 0 : i32
    return %arg0, %c0_i32, %c0_i32_0 : i32, i32, i32
  }
}

</mosaic_0001>

<llo_original>
// kernel: tpu_custom_call.1
$region0: #{tpu_custom_call.1}
  #allocation0 [shape = 'u32[]', space=smem, size = 0x4, offset = 0x4, fixed_abs, tag = 'smem constant byte address 0x4 - core index']
  #allocation1 [shape = 'u32[144,128]{1,0:T(1,128)}', space=vmem, size = 0x12000, scoped, tag = 'internal scratch']
  %s0 = inlined_call_operand.hbm [shape: f32[2,16,256], index: 0, kind: input, shape index: {}]
  %s1 = inlined_call_operand.vmem [shape: f32[16,4], index: 1, kind: input, shape index: {}]
  %s2 = inlined_call_operand.vmem [shape: f32[1,4], index: 2, kind: input, shape index: {}]
  %s3 = inlined_call_operand.vmem [shape: f32[4,16], index: 3, kind: input, shape index: {}]
  %s4 = inlined_call_operand.vmem [shape: f32[1,16], index: 4, kind: input, shape index: {}]
  %s5 = inlined_call_operand.hbm [shape: f32[2,16,256], index: 5, kind: output, shape index: {}]
  %s6 = sld [smem:[#allocation0]]
  $region34: #{tpu_custom_call.1} parent=0
    _
  %s8 = ssub.s32 1, %s6
  %s9 = scalar_select 0, %s8, %s6
  $region1: #{tpu_custom_call.1} parent=0
    #allocation2 [shape = 'u8[32768]{0}', space=vmem, size = 0x8000, scoped, tag = 'input window, operand 0, single buffered']
    #allocation3 [shape = 's32[1]{0}', space=sflag, size = 0x4, scoped, tag = 'scoped memory for tpu_custom_call.1']
    #allocation4 [shape = 's32[1]{0}', space=sflag, size = 0x4, scoped, tag = 'scoped memory for tpu_custom_call.1']
    #allocation5 [shape = 'u8[32768]{0}', space=vmem, size = 0x8000, scoped, tag = 'output window, operand 0, single buffered']
    %10 = vsyncpa [#allocation3], 0
    %11 = vsyncpa [#allocation4], 0
    // Predicated region
    $region2: #{tpu_custom_call.1} parent=1 // pred_check
      _
    $region3: #{tpu_custom_call.1} parent=1 // pred_check_branch
      %13 = sbr.rel (0) target = $region5
    $region4: #{tpu_custom_call.1} parent=1 // pred_region
      %s15 = ssub.s32 1024, 1024
      %16 = vsyncadd [#allocation3], %s15
      %s17 = sshll.u32 [#allocation2], 4
      %s18 = int_to_ptr.vmem [resolvable:$true] %s17
      %23 = dma.hbm_to_vmem [thread:$0]  %s0, 1024, %s18, [#allocation3], 256, 256, 16
    $region5: #{tpu_custom_call.1} parent=1 // pred_fallthru
      _
    // Predicated region
    $region6: #{tpu_custom_call.1} parent=1 // pred_check
      _
    $region7: #{tpu_custom_call.1} parent=1 // pred_check_branch
      %25 = sbr.rel (0) target = $region9
    $region8: #{tpu_custom_call.1} parent=1 // pred_region
      _
    $region9: #{tpu_custom_call.1} parent=1 // pred_fallthru
      _
    // Predicated region
    $region10: #{tpu_custom_call.1} parent=1 // pred_check
      _
    $region11: #{tpu_custom_call.1} parent=1 // pred_check_branch
      %27 = sbr.rel (0) target = $region13
    $region12: #{tpu_custom_call.1} parent=1 // pred_region
      _
    $region13: #{tpu_custom_call.1} parent=1 // pred_fallthru
      _
    // Predicated region
    $region14: #{tpu_custom_call.1} parent=1 // pred_check
      _
    $region15: #{tpu_custom_call.1} parent=1 // pred_check_branch
      %29 = sbr.rel (0) target = $region17
    $region16: #{tpu_custom_call.1} parent=1 // pred_region
      _
    $region17: #{tpu_custom_call.1} parent=1 // pred_fallthru
      _
    // Predicated region
    $region18: #{tpu_custom_call.1} parent=1 // pred_check
      _
    $region19: #{tpu_custom_call.1} parent=1 // pred_check_branch
      %31 = sbr.rel (0) target = $region21
    $region20: #{tpu_custom_call.1} parent=1 // pred_region
      _
    $region21: #{tpu_custom_call.1} parent=1 // pred_fallthru
      _
    // Predicated region
    $region22: #{tpu_custom_call.1} parent=1 // pred_check
      _
    $region23: #{tpu_custom_call.1} parent=1 // pred_check_branch
      %33 = sbr.rel (0) target = $region25
    $region24: #{tpu_custom_call.1} parent=1 // pred_region
      %34 = dma.done [#allocation3], 1024
    $region25: #{tpu_custom_call.1} parent=1 // pred_fallthru
      _
    %v35 = vld [vmem:[#allocation2] sm:$0xff]
    %v36 = vld [vmem:[#allocation2 + $0x8] sm:$0xff]
    %v37 = vld [vmem:[#allocation2 + $0x10] sm:$0xff]
    %v38 = vld [vmem:[#allocation2 + $0x18] sm:$0xff]
    %v39 = vld [vmem:[#allocation2 + $0x20] sm:$0xff]
    %v40 = vld [vmem:[#allocation2 + $0x28] sm:$0xff]
    %v41 = vld [vmem:[#allocation2 + $0x30] sm:$0xff]
    %v42 = vld [vmem:[#allocation2 + $0x38] sm:$0xff]
    %v43 = vadd.f32 %v35, %v36
    %44 = vadd.xlane.f32.xlu0 %v43
    %v45 = vpop.xlane.xlu0 %44
    %v46 = vadd.f32 %v37, %v38
    %47 = vadd.xlane.f32.xlu0 %v46
    %v48 = vpop.xlane.xlu0 %47
    %v49 = vadd.f32 %v39, %v40
    %50 = vadd.xlane.f32.xlu0 %v49
    %v51 = vpop.xlane.xlu0 %50
    %v52 = vadd.f32 %v41, %v42
    %53 = vadd.xlane.f32.xlu0 %v52
    %v54 = vpop.xlane.xlu0 %53
    %v55 = vmul.f32 %v45, 0.00390625
    %v56 = vmul.f32 %v48, 0.00390625
    %v57 = vmul.f32 %v51, 0.00390625
    %v58 = vmul.f32 %v54, 0.00390625
    %v59 = vld [vmem:[%s1] sm:$0xff]
    %v60 = vld [vmem:[%s1 + $0x8] sm:$0xff]
    %v61 = vld [vmem:[%s2] sm:$0x1]
    %v63 = vlaneseq
    %v64 = vshrl.u32 %v63, 7
    %v65 = vsub.s32 0, %v64
    %v66 = vrot.slane %v61, %v65
    %v72 = vlaneseq
    %v73 = vand.u32 %v72, 127
    %v74 = vlaneseq
    %v75 = vshrl.u32 %v74, 7
    %v76 = vsub.s32 %v73, %v75
    %v77 = vrot.slane %v55, %v76
    %v78 = vadd.s32 %v73, 4294967288
    %v79 = vlaneseq
    %v80 = vshrl.u32 %v79, 7
    %v81 = vsub.s32 %v78, %v80
    %v82 = vrot.slane %v56, %v81
    %vm83 = vcmask 130112
    %v84 = vsel %vm83, %v82, %v77
    %v85 = vlaneseq
    %v86 = vshrl.u32 %v85, 7
    %v87 = vsub.s32 %v73, %v86
    %v88 = vrot.slane %v57, %v87
    %v89 = vlaneseq
    %v90 = vshrl.u32 %v89, 7
    %v91 = vsub.s32 %v78, %v90
    %v92 = vrot.slane %v58, %v91
    %v93 = vsel %vm83, %v92, %v88
    %vm94 = vcmask 1041409
    %v95 = vsel %vm94, %v93, %v84
    %vm96 = vcmask 130048
    %v97 = vsel %vm96, %v95, 0
    %99 = vmatprep.subr.mxu0 0.0
    %100 = vmatpush1.msra.mxu0 0.0
    %101 = vmatprep.subr.mxu0 0.0
    %102 = vmatpush1.msra.mxu0 0.0
    %103 = vmatprep.subr.mxu0 0.0
    %104 = vmatpush1.msra.mxu0 0.0
    %105 = vmatprep.subr.mxu0 0.0
    %106 = vmatpush1.msra.mxu0 0.0
    %107 = vmatprep.subr.mxu0 0.0
    %108 = vmatpush1.msra.mxu0 0.0
    %109 = vmatprep.subr.mxu0 0.0
    %110 = vmatpush1.msra.mxu0 0.0
    %111 = vmatprep.subr.mxu0 0.0
    %112 = vmatpush1.msra.mxu0 0.0
    %113 = vmatprep.subr.mxu0 0.0
    %114 = vmatpush1.msra.mxu0 0.0
    %115 = vmatprep.subr.mxu0 0.0
    %116 = vmatpush1.msra.mxu0 0.0
    %117 = vmatprep.subr.mxu0 0.0
    %118 = vmatpush1.msra.mxu0 0.0
    %119 = vmatprep.subr.mxu0 0.0
    %120 = vmatpush1.msra.mxu0 0.0
    %121 = vmatprep.subr.mxu0 0.0
    %122 = vmatpush1.msra.mxu0 0.0
    %123 = vmatprep.subr.mxu0 0.0
    %124 = vmatpush1.msra.mxu0 0.0
    %125 = vmatprep.subr.mxu0 0.0
    %126 = vmatpush1.msra.mxu0 0.0
    %127 = vmatprep.subr.mxu0 0.0
    %v128 = vand.u32 %v60, 4294901760
    %129 = vmatpush1.msra.mxu0 %v128
    %130 = vmatprep.subr.mxu0 0.0
    %v131 = vand.u32 %v59, 4294901760
    %132 = vmatpush1.msra.mxu0 %v131
    %133 = vmatprep.subr.mxu0 0.0
    %134 = vmatpush2.msra.mxu0 0.0
    %135 = vmatprep.subr.mxu0 0.0
    %136 = vmatpush2.msra.mxu0 0.0
    %137 = vmatprep.subr.mxu0 0.0
    %138 = vmatpush2.msra.mxu0 0.0
    %139 = vmatprep.subr.mxu0 0.0
    %140 = vmatpush2.msra.mxu0 0.0
    %141 = vmatprep.subr.mxu0 0.0
    %142 = vmatpush2.msra.mxu0 0.0
    %143 = vmatprep.subr.mxu0 0.0
    %144 = vmatpush2.msra.mxu0 0.0
    %145 = vmatprep.subr.mxu0 0.0
    %146 = vmatpush2.msra.mxu0 0.0
    %147 = vmatprep.subr.mxu0 0.0
    %148 = vmatpush2.msra.mxu0 0.0
    %149 = vmatprep.subr.mxu0 0.0
    %150 = vmatpush2.msra.mxu0 0.0
    %151 = vmatprep.subr.mxu0 0.0
    %152 = vmatpush2.msra.mxu0 0.0
    %153 = vmatprep.subr.mxu0 0.0
    %154 = vmatpush2.msra.mxu0 0.0
    %155 = vmatprep.subr.mxu0 0.0
    %156 = vmatpush2.msra.mxu0 0.0
    %157 = vmatprep.subr.mxu0 0.0
    %158 = vmatpush2.msra.mxu0 0.0
    %159 = vmatprep.subr.mxu0 0.0
    %160 = vmatpush2.msra.mxu0 0.0
    %161 = vmatprep.subr.mxu0 0.0
    %162 = vmatpush2.msra.mxu0 0.0
    %163 = vmatprep.subr.mxu0 0.0
    %164 = vmatpush2.msra.mxu0 0.0
    %165 = vmatprep.mubr.f32.mxu0 0.0
    %v166 = vand.u32 %v97, 4294901760
    %v167 = vsub.f32 %v97, %v166
    %v168 = vand.u32 %v167, 4294901760
    %v169 = vsub.f32 %v167, %v168
    %v170 = vand.u32 %v169, 4294901760
    %171 = vmatmul.mubr.f32.gmra.mxu0 %v170
    %v172 = vpop.f32.mrf.mxu0
    %v173 = vadd.f32 %v66, %v172
    %v174 = vpop.f32.mrf.mxu0
    %175 = vdwg.mxu0
    %176 = vmatprep.subr.mxu0 0.0
    %177 = vmatpush1.msra.mxu0 0.0
    %178 = vmatprep.subr.mxu0 0.0
    %179 = vmatpush1.msra.mxu0 0.0
    %180 = vmatprep.subr.mxu0 0.0
    %181 = vmatpush1.msra.mxu0 0.0
    %182 = vmatprep.subr.mxu0 0.0
    %183 = vmatpush1.msra.mxu0 0.0
    %184 = vmatprep.subr.mxu0 0.0
    %185 = vmatpush1.msra.mxu0 0.0
    %186 = vmatprep.subr.mxu0 0.0
    %187 = vmatpush1.msra.mxu0 0.0
    %188 = vmatprep.subr.mxu0 0.0
    %189 = vmatpush1.msra.mxu0 0.0
    %190 = vmatprep.subr.mxu0 0.0
    %191 = vmatpush1.msra.mxu0 0.0
    %192 = vmatprep.subr.mxu0 0.0
    %193 = vmatpush1.msra.mxu0 0.0
    %194 = vmatprep.subr.mxu0 0.0
    %195 = vmatpush1.msra.mxu0 0.0
    %196 = vmatprep.subr.mxu0 0.0
    %197 = vmatpush1.msra.mxu0 0.0
    %198 = vmatprep.subr.mxu0 0.0
    %199 = vmatpush1.msra.mxu0 0.0
    %200 = vmatprep.subr.mxu0 0.0
    %201 = vmatpush1.msra.mxu0 0.0
    %202 = vmatprep.subr.mxu0 0.0
    %203 = vmatpush1.msra.mxu0 0.0
    %204 = vmatprep.subr.mxu0 0.0
    %v205 = vand.u32 %v60, 4294901760
    %v206 = vsub.f32 %v60, %v205
    %v207 = vand.u32 %v206, 4294901760
    %v208 = vsub.f32 %v206, %v207
    %v209 = vand.u32 %v208, 4294901760
    %210 = vmatpush1.msra.mxu0 %v209
    %211 = vmatprep.subr.mxu0 0.0
    %v212 = vand.u32 %v59, 4294901760
    %v213 = vsub.f32 %v59, %v212
    %v214 = vand.u32 %v213, 4294901760
    %v215 = vsub.f32 %v213, %v214
    %v216 = vand.u32 %v215, 4294901760
    %217 = vmatpush1.msra.mxu0 %v216
    %218 = vmatprep.subr.mxu0 0.0
    %219 = vmatpush2.msra.mxu0 0.0
    %220 = vmatprep.subr.mxu0 0.0
    %221 = vmatpush2.msra.mxu0 0.0
    %222 = vmatprep.subr.mxu0 0.0
    %223 = vmatpush2.msra.mxu0 0.0
    %224 = vmatprep.subr.mxu0 0.0
    %225 = vmatpush2.msra.mxu0 0.0
    %226 = vmatprep.subr.mxu0 0.0
    %227 = vmatpush2.msra.mxu0 0.0
    %228 = vmatprep.subr.mxu0 0.0
    %229 = vmatpush2.msra.mxu0 0.0
    %230 = vmatprep.subr.mxu0 0.0
    %231 = vmatpush2.msra.mxu0 0.0
    %232 = vmatprep.subr.mxu0 0.0
    %233 = vmatpush2.msra.mxu0 0.0
    %234 = vmatprep.subr.mxu0 0.0
    %235 = vmatpush2.msra.mxu0 0.0
    %236 = vmatprep.subr.mxu0 0.0
    %237 = vmatpush2.msra.mxu0 0.0
    %238 = vmatprep.subr.mxu0 0.0
    %239 = vmatpush2.msra.mxu0 0.0
    %240 = vmatprep.subr.mxu0 0.0
    %241 = vmatpush2.msra.mxu0 0.0
    %242 = vmatprep.subr.mxu0 0.0
    %243 = vmatpush2.msra.mxu0 0.0
    %244 = vmatprep.subr.mxu0 0.0
    %245 = vmatpush2.msra.mxu0 0.0
    %246 = vmatprep.subr.mxu0 0.0
    %247 = vmatpush2.msra.mxu0 0.0
    %248 = vmatprep.subr.mxu0 0.0
    %249 = vmatpush2.msra.mxu0 0.0
    %250 = vmatprep.mubr.f32.mxu0 0.0
    %v251 = vand.u32 %v97, 4294901760
    %252 = vmatmul.mubr.f32.gmra.mxu0 %v251
    %v253 = vpop.f32.mrf.mxu0
    %v254 = vadd.f32 %v173, %v253
    %v255 = vpop.f32.mrf.mxu0
    %256 = vdwg.mxu0
    %257 = vmatprep.subr.mxu0 0.0
    %258 = vmatpush1.msra.mxu0 0.0
    %259 = vmatprep.subr.mxu0 0.0
    %260 = vmatpush1.msra.mxu0 0.0
    %261 = vmatprep.subr.mxu0 0.0
    %262 = vmatpush1.msra.mxu0 0.0
    %263 = vmatprep.subr.mxu0 0.0
    %264 = vmatpush1.msra.mxu0 0.0
    %265 = vmatprep.subr.mxu0 0.0
    %266 = vmatpush1.msra.mxu0 0.0
    %267 = vmatprep.subr.mxu0 0.0
    %268 = vmatpush1.msra.mxu0 0.0
    %269 = vmatprep.subr.mxu0 0.0
    %270 = vmatpush1.msra.mxu0 0.0
    %271 = vmatprep.subr.mxu0 0.0
    %272 = vmatpush1.msra.mxu0 0.0
    %273 = vmatprep.subr.mxu0 0.0
    %274 = vmatpush1.msra.mxu0 0.0
    %275 = vmatprep.subr.mxu0 0.0
    %276 = vmatpush1.msra.mxu0 0.0
    %277 = vmatprep.subr.mxu0 0.0
    %278 = vmatpush1.msra.mxu0 0.0
    %279 = vmatprep.subr.mxu0 0.0
    %280 = vmatpush1.msra.mxu0 0.0
    %281 = vmatprep.subr.mxu0 0.0
    %282 = vmatpush1.msra.mxu0 0.0
    %283 = vmatprep.subr.mxu0 0.0
    %284 = vmatpush1.msra.mxu0 0.0
    %285 = vmatprep.subr.mxu0 0.0
    %v286 = vand.u32 %v60, 4294901760
    %v287 = vsub.f32 %v60, %v286
    %288 = vmatpush1.msra.mxu0 %v287
    %289 = vmatprep.subr.mxu0 0.0
    %v290 = vand.u32 %v59, 4294901760
    %v291 = vsub.f32 %v59, %v290
    %292 = vmatpush1.msra.mxu0 %v291
    %293 = vmatprep.subr.mxu0 0.0
    %294 = vmatpush2.msra.mxu0 0.0
    %295 = vmatprep.subr.mxu0 0.0
    %296 = vmatpush2.msra.mxu0 0.0
    %297 = vmatprep.subr.mxu0 0.0
    %298 = vmatpush2.msra.mxu0 0.0
    %299 = vmatprep.subr.mxu0 0.0
    %300 = vmatpush2.msra.mxu0 0.0
    %301 = vmatprep.subr.mxu0 0.0
    %302 = vmatpush2.msra.mxu0 0.0
    %303 = vmatprep.subr.mxu0 0.0
    %304 = vmatpush2.msra.mxu0 0.0
    %305 = vmatprep.subr.mxu0 0.0
    %306 = vmatpush2.msra.mxu0 0.0
    %307 = vmatprep.subr.mxu0 0.0
    %308 = vmatpush2.msra.mxu0 0.0
    %309 = vmatprep.subr.mxu0 0.0
    %310 = vmatpush2.msra.mxu0 0.0
    %311 = vmatprep.subr.mxu0 0.0
    %312 = vmatpush2.msra.mxu0 0.0
    %313 = vmatprep.subr.mxu0 0.0
    %314 = vmatpush2.msra.mxu0 0.0
    %315 = vmatprep.subr.mxu0 0.0
    %316 = vmatpush2.msra.mxu0 0.0
    %317 = vmatprep.subr.mxu0 0.0
    %318 = vmatpush2.msra.mxu0 0.0
    %319 = vmatprep.subr.mxu0 0.0
    %320 = vmatpush2.msra.mxu0 0.0
    %321 = vmatprep.subr.mxu0 0.0
    %322 = vmatpush2.msra.mxu0 0.0
    %323 = vmatprep.subr.mxu0 0.0
    %324 = vmatpush2.msra.mxu0 0.0
    %325 = vmatprep.mubr.f32.mxu0 0.0
    %v326 = vand.u32 %v97, 4294901760
    %v327 = vsub.f32 %v97, %v326
    %328 = vmatmul.mubr.f32.gmra.mxu0 %v327
    %v329 = vpop.f32.mrf.mxu0
    %v330 = vadd.f32 %v254, %v329
    %v331 = vpop.f32.mrf.mxu0
    %332 = vdwg.mxu0
    %333 = vmatprep.subr.mxu0 0.0
    %334 = vmatpush1.msra.mxu0 0.0
    %335 = vmatprep.subr.mxu0 0.0
    %336 = vmatpush1.msra.mxu0 0.0
    %337 = vmatprep.subr.mxu0 0.0
    %338 = vmatpush1.msra.mxu0 0.0
    %339 = vmatprep.subr.mxu0 0.0
    %340 = vmatpush1.msra.mxu0 0.0
    %341 = vmatprep.subr.mxu0 0.0
    %342 = vmatpush1.msra.mxu0 0.0
    %343 = vmatprep.subr.mxu0 0.0
    %344 = vmatpush1.msra.mxu0 0.0
    %345 = vmatprep.subr.mxu0 0.0
    %346 = vmatpush1.msra.mxu0 0.0
    %347 = vmatprep.subr.mxu0 0.0
    %348 = vmatpush1.msra.mxu0 0.0
    %349 = vmatprep.subr.mxu0 0.0
    %350 = vmatpush1.msra.mxu0 0.0
    %351 = vmatprep.subr.mxu0 0.0
    %352 = vmatpush1.msra.mxu0 0.0
    %353 = vmatprep.subr.mxu0 0.0
    %354 = vmatpush1.msra.mxu0 0.0
    %355 = vmatprep.subr.mxu0 0.0
    %356 = vmatpush1.msra.mxu0 0.0
    %357 = vmatprep.subr.mxu0 0.0
    %358 = vmatpush1.msra.mxu0 0.0
    %359 = vmatprep.subr.mxu0 0.0
    %360 = vmatpush1.msra.mxu0 0.0
    %361 = vmatprep.subr.mxu0 0.0
    %v362 = vand.u32 %v60, 4294901760
    %363 = vmatpush1.msra.mxu0 %v362
    %364 = vmatprep.subr.mxu0 0.0
    %v365 = vand.u32 %v59, 4294901760
    %366 = vmatpush1.msra.mxu0 %v365
    %367 = vmatprep.subr.mxu0 0.0
    %368 = vmatpush2.msra.mxu0 0.0
    %369 = vmatprep.subr.mxu0 0.0
    %370 = vmatpush2.msra.mxu0 0.0
    %371 = vmatprep.subr.mxu0 0.0
    %372 = vmatpush2.msra.mxu0 0.0
    %373 = vmatprep.subr.mxu0 0.0
    %374 = vmatpush2.msra.mxu0 0.0
    %375 = vmatprep.subr.mxu0 0.0
    %376 = vmatpush2.msra.mxu0 0.0
    %377 = vmatprep.subr.mxu0 0.0
    %378 = vmatpush2.msra.mxu0 0.0
    %379 = vmatprep.subr.mxu0 0.0
    %380 = vmatpush2.msra.mxu0 0.0
    %381 = vmatprep.subr.mxu0 0.0
    %382 = vmatpush2.msra.mxu0 0.0
    %383 = vmatprep.subr.mxu0 0.0
    %384 = vmatpush2.msra.mxu0 0.0
    %385 = vmatprep.subr.mxu0 0.0
    %386 = vmatpush2.msra.mxu0 0.0
    %387 = vmatprep.subr.mxu0 0.0
    %388 = vmatpush2.msra.mxu0 0.0
    %389 = vmatprep.subr.mxu0 0.0
    %390 = vmatpush2.msra.mxu0 0.0
    %391 = vmatprep.subr.mxu0 0.0
    %392 = vmatpush2.msra.mxu0 0.0
    %393 = vmatprep.subr.mxu0 0.0
    %394 = vmatpush2.msra.mxu0 0.0
    %395 = vmatprep.subr.mxu0 0.0
    %396 = vmatpush2.msra.mxu0 0.0
    %397 = vmatprep.subr.mxu0 0.0
    %398 = vmatpush2.msra.mxu0 0.0
    %399 = vmatprep.mubr.f32.mxu0 0.0
    %v400 = vand.u32 %v97, 4294901760
    %v401 = vsub.f32 %v97, %v400
    %v402 = vand.u32 %v401, 4294901760
    %403 = vmatmul.mubr.f32.gmra.mxu0 %v402
    %v404 = vpop.f32.mrf.mxu0
    %v405 = vadd.f32 %v330, %v404
    %v406 = vpop.f32.mrf.mxu0
    %407 = vdwg.mxu0
    %408 = vmatprep.subr.mxu0 0.0
    %409 = vmatpush1.msra.mxu0 0.0
    %410 = vmatprep.subr.mxu0 0.0
    %411 = vmatpush1.msra.mxu0 0.0
    %412 = vmatprep.subr.mxu0 0.0
    %413 = vmatpush1.msra.mxu0 0.0
    %414 = vmatprep.subr.mxu0 0.0
    %415 = vmatpush1.msra.mxu0 0.0
    %416 = vmatprep.subr.mxu0 0.0
    %417 = vmatpush1.msra.mxu0 0.0
    %418 = vmatprep.subr.mxu0 0.0
    %419 = vmatpush1.msra.mxu0 0.0
    %420 = vmatprep.subr.mxu0 0.0
    %421 = vmatpush1.msra.mxu0 0.0
    %422 = vmatprep.subr.mxu0 0.0
    %423 = vmatpush1.msra.mxu0 0.0
    %424 = vmatprep.subr.mxu0 0.0
    %425 = vmatpush1.msra.mxu0 0.0
    %426 = vmatprep.subr.mxu0 0.0
    %427 = vmatpush1.msra.mxu0 0.0
    %428 = vmatprep.subr.mxu0 0.0
    %429 = vmatpush1.msra.mxu0 0.0
    %430 = vmatprep.subr.mxu0 0.0
    %431 = vmatpush1.msra.mxu0 0.0
    %432 = vmatprep.subr.mxu0 0.0
    %433 = vmatpush1.msra.mxu0 0.0
    %434 = vmatprep.subr.mxu0 0.0
    %435 = vmatpush1.msra.mxu0 0.0
    %436 = vmatprep.subr.mxu0 0.0
    %v437 = vand.u32 %v60, 4294901760
    %v438 = vsub.f32 %v60, %v437
    %v439 = vand.u32 %v438, 4294901760
    %440 = vmatpush1.msra.mxu0 %v439
    %441 = vmatprep.subr.mxu0 0.0
    %v442 = vand.u32 %v59, 4294901760
    %v443 = vsub.f32 %v59, %v442
    %v444 = vand.u32 %v443, 4294901760
    %445 = vmatpush1.msra.mxu0 %v444
    %446 = vmatprep.subr.mxu0 0.0
    %447 = vmatpush2.msra.mxu0 0.0
    %448 = vmatprep.subr.mxu0 0.0
    %449 = vmatpush2.msra.mxu0 0.0
    %450 = vmatprep.subr.mxu0 0.0
    %451 = vmatpush2.msra.mxu0 0.0
    %452 = vmatprep.subr.mxu0 0.0
    %453 = vmatpush2.msra.mxu0 0.0
    %454 = vmatprep.subr.mxu0 0.0
    %455 = vmatpush2.msra.mxu0 0.0
    %456 = vmatprep.subr.mxu0 0.0
    %457 = vmatpush2.msra.mxu0 0.0
    %458 = vmatprep.subr.mxu0 0.0
    %459 = vmatpush2.msra.mxu0 0.0
    %460 = vmatprep.subr.mxu0 0.0
    %461 = vmatpush2.msra.mxu0 0.0
    %462 = vmatprep.subr.mxu0 0.0
    %463 = vmatpush2.msra.mxu0 0.0
    %464 = vmatprep.subr.mxu0 0.0
    %465 = vmatpush2.msra.mxu0 0.0
    %466 = vmatprep.subr.mxu0 0.0
    %467 = vmatpush2.msra.mxu0 0.0
    %468 = vmatprep.subr.mxu0 0.0
    %469 = vmatpush2.msra.mxu0 0.0
    %470 = vmatprep.subr.mxu0 0.0
    %471 = vmatpush2.msra.mxu0 0.0
    %472 = vmatprep.subr.mxu0 0.0
    %473 = vmatpush2.msra.mxu0 0.0
    %474 = vmatprep.subr.mxu0 0.0
    %475 = vmatpush2.msra.mxu0 0.0
    %476 = vmatprep.subr.mxu0 0.0
    %477 = vmatpush2.msra.mxu0 0.0
    %478 = vmatprep.mubr.f32.mxu0 0.0
    %v479 = vand.u32 %v97, 4294901760
    %480 = vmatmul.mubr.f32.gmra.mxu0 %v479
    %v481 = vpop.f32.mrf.mxu0
    %v482 = vadd.f32 %v405, %v481
    %v483 = vpop.f32.mrf.mxu0
    %484 = vdwg.mxu0
    %485 = vmatprep.subr.mxu0 0.0
    %486 = vmatpush1.msra.mxu0 0.0
    %487 = vmatprep.subr.mxu0 0.0
    %488 = vmatpush1.msra.mxu0 0.0
    %489 = vmatprep.subr.mxu0 0.0
    %490 = vmatpush1.msra.mxu0 0.0
    %491 = vmatprep.subr.mxu0 0.0
    %492 = vmatpush1.msra.mxu0 0.0
    %493 = vmatprep.subr.mxu0 0.0
    %494 = vmatpush1.msra.mxu0 0.0
    %495 = vmatprep.subr.mxu0 0.0
    %496 = vmatpush1.msra.mxu0 0.0
    %497 = vmatprep.subr.mxu0 0.0
    %498 = vmatpush1.msra.mxu0 0.0
    %499 = vmatprep.subr.mxu0 0.0
    %500 = vmatpush1.msra.mxu0 0.0
    %501 = vmatprep.subr.mxu0 0.0
    %502 = vmatpush1.msra.mxu0 0.0
    %503 = vmatprep.subr.mxu0 0.0
    %504 = vmatpush1.msra.mxu0 0.0
    %505 = vmatprep.subr.mxu0 0.0
    %506 = vmatpush1.msra.mxu0 0.0
    %507 = vmatprep.subr.mxu0 0.0
    %508 = vmatpush1.msra.mxu0 0.0
    %509 = vmatprep.subr.mxu0 0.0
    %510 = vmatpush1.msra.mxu0 0.0
    %511 = vmatprep.subr.mxu0 0.0
    %512 = vmatpush1.msra.mxu0 0.0
    %513 = vmatprep.subr.mxu0 0.0
    %v514 = vand.u32 %v60, 4294901760
    %515 = vmatpush1.msra.mxu0 %v514
    %516 = vmatprep.subr.mxu0 0.0
    %v517 = vand.u32 %v59, 4294901760
    %518 = vmatpush1.msra.mxu0 %v517
    %519 = vmatprep.subr.mxu0 0.0
    %520 = vmatpush2.msra.mxu0 0.0
    %521 = vmatprep.subr.mxu0 0.0
    %522 = vmatpush2.msra.mxu0 0.0
    %523 = vmatprep.subr.mxu0 0.0
    %524 = vmatpush2.msra.mxu0 0.0
    %525 = vmatprep.subr.mxu0 0.0
    %526 = vmatpush2.msra.mxu0 0.0
    %527 = vmatprep.subr.mxu0 0.0
    %528 = vmatpush2.msra.mxu0 0.0
    %529 = vmatprep.subr.mxu0 0.0
    %530 = vmatpush2.msra.mxu0 0.0
    %531 = vmatprep.subr.mxu0 0.0
    %532 = vmatpush2.msra.mxu0 0.0
    %533 = vmatprep.subr.mxu0 0.0
    %534 = vmatpush2.msra.mxu0 0.0
    %535 = vmatprep.subr.mxu0 0.0
    %536 = vmatpush2.msra.mxu0 0.0
    %537 = vmatprep.subr.mxu0 0.0
    %538 = vmatpush2.msra.mxu0 0.0
    %539 = vmatprep.subr.mxu0 0.0
    %540 = vmatpush2.msra.mxu0 0.0
    %541 = vmatprep.subr.mxu0 0.0
    %542 = vmatpush2.msra.mxu0 0.0
    %543 = vmatprep.subr.mxu0 0.0
    %544 = vmatpush2.msra.mxu0 0.0
    %545 = vmatprep.subr.mxu0 0.0
    %546 = vmatpush2.msra.mxu0 0.0
    %547 = vmatprep.subr.mxu0 0.0
    %548 = vmatpush2.msra.mxu0 0.0
    %549 = vmatprep.subr.mxu0 0.0
    %550 = vmatpush2.msra.mxu0 0.0
    %551 = vmatprep.mubr.f32.mxu0 0.0
    %v552 = vand.u32 %v97, 4294901760
    %553 = vmatmul.mubr.f32.gmra.mxu0 %v552
    %v554 = vpop.f32.mrf.mxu0
    %v555 = vadd.f32 %v482, %v554
    %v556 = vpop.f32.mrf.mxu0
    %557 = vdwg.mxu0
    %v558 = vmax.f32 %v555, 0.0
    %v559 = vld [vmem:[%s3] sm:$0xf]
    %v560 = vld [vmem:[%s4] sm:$0x1]
    %v562 = vlaneseq
    %v563 = vshrl.u32 %v562, 7
    %v564 = vsub.s32 0, %v563
    %v565 = vrot.slane %v560, %v564
    %vm567 = vcmask 31744
    %v569 = vsel %vm567, %v558, 0
    %vm571 = vcmask 1043456
    %v573 = vsel %vm571, %v559, 0
    %575 = vmatprep.subr.mxu0 0.0
    %576 = vmatpush1.msra.mxu0 0.0
    %577 = vmatprep.subr.mxu0 0.0
    %578 = vmatpush1.msra.mxu0 0.0
    %579 = vmatprep.subr.mxu0 0.0
    %580 = vmatpush1.msra.mxu0 0.0
    %581 = vmatprep.subr.mxu0 0.0
    %582 = vmatpush1.msra.mxu0 0.0
    %583 = vmatprep.subr.mxu0 0.0
    %584 = vmatpush1.msra.mxu0 0.0
    %585 = vmatprep.subr.mxu0 0.0
    %586 = vmatpush1.msra.mxu0 0.0
    %587 = vmatprep.subr.mxu0 0.0
    %588 = vmatpush1.msra.mxu0 0.0
    %589 = vmatprep.subr.mxu0 0.0
    %590 = vmatpush1.msra.mxu0 0.0
    %591 = vmatprep.subr.mxu0 0.0
    %592 = vmatpush1.msra.mxu0 0.0
    %593 = vmatprep.subr.mxu0 0.0
    %594 = vmatpush1.msra.mxu0 0.0
    %595 = vmatprep.subr.mxu0 0.0
    %596 = vmatpush1.msra.mxu0 0.0
    %597 = vmatprep.subr.mxu0 0.0
    %598 = vmatpush1.msra.mxu0 0.0
    %599 = vmatprep.subr.mxu0 0.0
    %600 = vmatpush1.msra.mxu0 0.0
    %601 = vmatprep.subr.mxu0 0.0
    %602 = vmatpush1.msra.mxu0 0.0
    %603 = vmatprep.subr.mxu0 0.0
    %604 = vmatpush1.msra.mxu0 0.0
    %605 = vmatprep.subr.mxu0 0.0
    %v606 = vand.u32 %v573, 4294901760
    %607 = vmatpush1.msra.mxu0 %v606
    %608 = vmatprep.subr.mxu0 0.0
    %609 = vmatpush2.msra.mxu0 0.0
    %610 = vmatprep.subr.mxu0 0.0
    %611 = vmatpush2.msra.mxu0 0.0
    %612 = vmatprep.subr.mxu0 0.0
    %613 = vmatpush2.msra.mxu0 0.0
    %614 = vmatprep.subr.mxu0 0.0
    %615 = vmatpush2.msra.mxu0 0.0
    %616 = vmatprep.subr.mxu0 0.0
    %617 = vmatpush2.msra.mxu0 0.0
    %618 = vmatprep.subr.mxu0 0.0
    %619 = vmatpush2.msra.mxu0 0.0
    %620 = vmatprep.subr.mxu0 0.0
    %621 = vmatpush2.msra.mxu0 0.0
    %622 = vmatprep.subr.mxu0 0.0
    %623 = vmatpush2.msra.mxu0 0.0
    %624 = vmatprep.subr.mxu0 0.0
    %625 = vmatpush2.msra.mxu0 0.0
    %626 = vmatprep.subr.mxu0 0.0
    %627 = vmatpush2.msra.mxu0 0.0
    %628 = vmatprep.subr.mxu0 0.0
    %629 = vmatpush2.msra.mxu0 0.0
    %630 = vmatprep.subr.mxu0 0.0
    %631 = vmatpush2.msra.mxu0 0.0
    %632 = vmatprep.subr.mxu0 0.0
    %633 = vmatpush2.msra.mxu0 0.0
    %634 = vmatprep.subr.mxu0 0.0
    %635 = vmatpush2.msra.mxu0 0.0
    %636 = vmatprep.subr.mxu0 0.0
    %637 = vmatpush2.msra.mxu0 0.0
    %638 = vmatprep.subr.mxu0 0.0
    %639 = vmatpush2.msra.mxu0 0.0
    %640 = vmatprep.mubr.f32.mxu0 0.0
    %v641 = vand.u32 %v569, 4294901760
    %v642 = vsub.f32 %v569, %v641
    %v643 = vand.u32 %v642, 4294901760
    %v644 = vsub.f32 %v642, %v643
    %v645 = vand.u32 %v644, 4294901760
    %646 = vmatmul.mubr.f32.gmra.mxu0 %v645
    %v647 = vpop.f32.mrf.mxu0
    %v648 = vadd.f32 %v565, %v647
    %v649 = vpop.f32.mrf.mxu0
    %650 = vdwg.mxu0
    %651 = vmatprep.subr.mxu0 0.0
    %652 = vmatpush1.msra.mxu0 0.0
    %653 = vmatprep.subr.mxu0 0.0
    %654 = vmatpush1.msra.mxu0 0.0
    %655 = vmatprep.subr.mxu0 0.0
    %656 = vmatpush1.msra.mxu0 0.0
    %657 = vmatprep.subr.mxu0 0.0
    %658 = vmatpush1.msra.mxu0 0.0
    %659 = vmatprep.subr.mxu0 0.0
    %660 = vmatpush1.msra.mxu0 0.0
    %661 = vmatprep.subr.mxu0 0.0
    %662 = vmatpush1.msra.mxu0 0.0
    %663 = vmatprep.subr.mxu0 0.0
    %664 = vmatpush1.msra.mxu0 0.0
    %665 = vmatprep.subr.mxu0 0.0
    %666 = vmatpush1.msra.mxu0 0.0
    %667 = vmatprep.subr.mxu0 0.0
    %668 = vmatpush1.msra.mxu0 0.0
    %669 = vmatprep.subr.mxu0 0.0
    %670 = vmatpush1.msra.mxu0 0.0
    %671 = vmatprep.subr.mxu0 0.0
    %672 = vmatpush1.msra.mxu0 0.0
    %673 = vmatprep.subr.mxu0 0.0
    %674 = vmatpush1.msra.mxu0 0.0
    %675 = vmatprep.subr.mxu0 0.0
    %676 = vmatpush1.msra.mxu0 0.0
    %677 = vmatprep.subr.mxu0 0.0
    %678 = vmatpush1.msra.mxu0 0.0
    %679 = vmatprep.subr.mxu0 0.0
    %680 = vmatpush1.msra.mxu0 0.0
    %681 = vmatprep.subr.mxu0 0.0
    %v682 = vand.u32 %v573, 4294901760
    %v683 = vsub.f32 %v573, %v682
    %v684 = vand.u32 %v683, 4294901760
    %v685 = vsub.f32 %v683, %v684
    %v686 = vand.u32 %v685, 4294901760
    %687 = vmatpush1.msra.mxu0 %v686
    %688 = vmatprep.subr.mxu0 0.0
    %689 = vmatpush2.msra.mxu0 0.0
    %690 = vmatprep.subr.mxu0 0.0
    %691 = vmatpush2.msra.mxu0 0.0
    %692 = vmatprep.subr.mxu0 0.0
    %693 = vmatpush2.msra.mxu0 0.0
    %694 = vmatprep.subr.mxu0 0.0
    %695 = vmatpush2.msra.mxu0 0.0
    %696 = vmatprep.subr.mxu0 0.0
    %697 = vmatpush2.msra.mxu0 0.0
    %698 = vmatprep.subr.mxu0 0.0
    %699 = vmatpush2.msra.mxu0 0.0
    %700 = vmatprep.subr.mxu0 0.0
    %701 = vmatpush2.msra.mxu0 0.0
    %702 = vmatprep.subr.mxu0 0.0
    %703 = vmatpush2.msra.mxu0 0.0
    %704 = vmatprep.subr.mxu0 0.0
    %705 = vmatpush2.msra.mxu0 0.0
    %706 = vmatprep.subr.mxu0 0.0
    %707 = vmatpush2.msra.mxu0 0.0
    %708 = vmatprep.subr.mxu0 0.0
    %709 = vmatpush2.msra.mxu0 0.0
    %710 = vmatprep.subr.mxu0 0.0
    %711 = vmatpush2.msra.mxu0 0.0
    %712 = vmatprep.subr.mxu0 0.0
    %713 = vmatpush2.msra.mxu0 0.0
    %714 = vmatprep.subr.mxu0 0.0
    %715 = vmatpush2.msra.mxu0 0.0
    %716 = vmatprep.subr.mxu0 0.0
    %717 = vmatpush2.msra.mxu0 0.0
    %718 = vmatprep.subr.mxu0 0.0
    %719 = vmatpush2.msra.mxu0 0.0
    %720 = vmatprep.mubr.f32.mxu0 0.0
    %v721 = vand.u32 %v569, 4294901760
    %722 = vmatmul.mubr.f32.gmra.mxu0 %v721
    %v723 = vpop.f32.mrf.mxu0
    %v724 = vadd.f32 %v648, %v723
    %v725 = vpop.f32.mrf.mxu0
    %726 = vdwg.mxu0
    %727 = vmatprep.subr.mxu0 0.0
    %728 = vmatpush1.msra.mxu0 0.0
    %729 = vmatprep.subr.mxu0 0.0
    %730 = vmatpush1.msra.mxu0 0.0
    %731 = vmatprep.subr.mxu0 0.0
    %732 = vmatpush1.msra.mxu0 0.0
    %733 = vmatprep.subr.mxu0 0.0
    %734 = vmatpush1.msra.mxu0 0.0
    %735 = vmatprep.subr.mxu0 0.0
    %736 = vmatpush1.msra.mxu0 0.0
    %737 = vmatprep.subr.mxu0 0.0
    %738 = vmatpush1.msra.mxu0 0.0
    %739 = vmatprep.subr.mxu0 0.0
    %740 = vmatpush1.msra.mxu0 0.0
    %741 = vmatprep.subr.mxu0 0.0
    %742 = vmatpush1.msra.mxu0 0.0
    %743 = vmatprep.subr.mxu0 0.0
    %744 = vmatpush1.msra.mxu0 0.0
    %745 = vmatprep.subr.mxu0 0.0
    %746 = vmatpush1.msra.mxu0 0.0
    %747 = vmatprep.subr.mxu0 0.0
    %748 = vmatpush1.msra.mxu0 0.0
    %749 = vmatprep.subr.mxu0 0.0
    %750 = vmatpush1.msra.mxu0 0.0
    %751 = vmatprep.subr.mxu0 0.0
    %752 = vmatpush1.msra.mxu0 0.0
    %753 = vmatprep.subr.mxu0 0.0
    %754 = vmatpush1.msra.mxu0 0.0
    %755 = vmatprep.subr.mxu0 0.0
    %756 = vmatpush1.msra.mxu0 0.0
    %757 = vmatprep.subr.mxu0 0.0
    %v758 = vand.u32 %v573, 4294901760
    %v759 = vsub.f32 %v573, %v758
    %760 = vmatpush1.msra.mxu0 %v759
    %761 = vmatprep.subr.mxu0 0.0
    %762 = vmatpush2.msra.mxu0 0.0
    %763 = vmatprep.subr.mxu0 0.0
    %764 = vmatpush2.msra.mxu0 0.0
    %765 = vmatprep.subr.mxu0 0.0
    %766 = vmatpush2.msra.mxu0 0.0
    %767 = vmatprep.subr.mxu0 0.0
    %768 = vmatpush2.msra.mxu0 0.0
    %769 = vmatprep.subr.mxu0 0.0
    %770 = vmatpush2.msra.mxu0 0.0
    %771 = vmatprep.subr.mxu0 0.0
    %772 = vmatpush2.msra.mxu0 0.0
    %773 = vmatprep.subr.mxu0 0.0
    %774 = vmatpush2.msra.mxu0 0.0
    %775 = vmatprep.subr.mxu0 0.0
    %776 = vmatpush2.msra.mxu0 0.0
    %777 = vmatprep.subr.mxu0 0.0
    %778 = vmatpush2.msra.mxu0 0.0
    %779 = vmatprep.subr.mxu0 0.0
    %780 = vmatpush2.msra.mxu0 0.0
    %781 = vmatprep.subr.mxu0 0.0
    %782 = vmatpush2.msra.mxu0 0.0
    %783 = vmatprep.subr.mxu0 0.0
    %784 = vmatpush2.msra.mxu0 0.0
    %785 = vmatprep.subr.mxu0 0.0
    %786 = vmatpush2.msra.mxu0 0.0
    %787 = vmatprep.subr.mxu0 0.0
    %788 = vmatpush2.msra.mxu0 0.0
    %789 = vmatprep.subr.mxu0 0.0
    %790 = vmatpush2.msra.mxu0 0.0
    %791 = vmatprep.subr.mxu0 0.0
    %792 = vmatpush2.msra.mxu0 0.0
    %793 = vmatprep.mubr.f32.mxu0 0.0
    %v794 = vand.u32 %v569, 4294901760
    %v795 = vsub.f32 %v569, %v794
    %796 = vmatmul.mubr.f32.gmra.mxu0 %v795
    %v797 = vpop.f32.mrf.mxu0
    %v798 = vadd.f32 %v724, %v797
    %v799 = vpop.f32.mrf.mxu0
    %800 = vdwg.mxu0
    %801 = vmatprep.subr.mxu0 0.0
    %802 = vmatpush1.msra.mxu0 0.0
    %803 = vmatprep.subr.mxu0 0.0
    %804 = vmatpush1.msra.mxu0 0.0
    %805 = vmatprep.subr.mxu0 0.0
    %806 = vmatpush1.msra.mxu0 0.0
    %807 = vmatprep.subr.mxu0 0.0
    %808 = vmatpush1.msra.mxu0 0.0
    %809 = vmatprep.subr.mxu0 0.0
    %810 = vmatpush1.msra.mxu0 0.0
    %811 = vmatprep.subr.mxu0 0.0
    %812 = vmatpush1.msra.mxu0 0.0
    %813 = vmatprep.subr.mxu0 0.0
    %814 = vmatpush1.msra.mxu0 0.0
    %815 = vmatprep.subr.mxu0 0.0
    %816 = vmatpush1.msra.mxu0 0.0
    %817 = vmatprep.subr.mxu0 0.0
    %818 = vmatpush1.msra.mxu0 0.0
    %819 = vmatprep.subr.mxu0 0.0
    %820 = vmatpush1.msra.mxu0 0.0
    %821 = vmatprep.subr.mxu0 0.0
    %822 = vmatpush1.msra.mxu0 0.0
    %823 = vmatprep.subr.mxu0 0.0
    %824 = vmatpush1.msra.mxu0 0.0
    %825 = vmatprep.subr.mxu0 0.0
    %826 = vmatpush1.msra.mxu0 0.0
    %827 = vmatprep.subr.mxu0 0.0
    %828 = vmatpush1.msra.mxu0 0.0
    %829 = vmatprep.subr.mxu0 0.0
    %830 = vmatpush1.msra.mxu0 0.0
    %831 = vmatprep.subr.mxu0 0.0
    %v832 = vand.u32 %v573, 4294901760
    %833 = vmatpush1.msra.mxu0 %v832
    %834 = vmatprep.subr.mxu0 0.0
    %835 = vmatpush2.msra.mxu0 0.0
    %836 = vmatprep.subr.mxu0 0.0
    %837 = vmatpush2.msra.mxu0 0.0
    %838 = vmatprep.subr.mxu0 0.0
    %839 = vmatpush2.msra.mxu0 0.0
    %840 = vmatprep.subr.mxu0 0.0
    %841 = vmatpush2.msra.mxu0 0.0
    %842 = vmatprep.subr.mxu0 0.0
    %843 = vmatpush2.msra.mxu0 0.0
    %844 = vmatprep.subr.mxu0 0.0
    %845 = vmatpush2.msra.mxu0 0.0
    %846 = vmatprep.subr.mxu0 0.0
    %847 = vmatpush2.msra.mxu0 0.0
    %848 = vmatprep.subr.mxu0 0.0
    %849 = vmatpush2.msra.mxu0 0.0
    %850 = vmatprep.subr.mxu0 0.0
    %851 = vmatpush2.msra.mxu0 0.0
    %852 = vmatprep.subr.mxu0 0.0
    %853 = vmatpush2.msra.mxu0 0.0
    %854 = vmatprep.subr.mxu0 0.0
    %855 = vmatpush2.msra.mxu0 0.0
    %856 = vmatprep.subr.mxu0 0.0
    %857 = vmatpush2.msra.mxu0 0.0
    %858 = vmatprep.subr.mxu0 0.0
    %859 = vmatpush2.msra.mxu0 0.0
    %860 = vmatprep.subr.mxu0 0.0
    %861 = vmatpush2.msra.mxu0 0.0
    %862 = vmatprep.subr.mxu0 0.0
    %863 = vmatpush2.msra.mxu0 0.0
    %864 = vmatprep.subr.mxu0 0.0
    %865 = vmatpush2.msra.mxu0 0.0
    %866 = vmatprep.mubr.f32.mxu0 0.0
    %v867 = vand.u32 %v569, 4294901760
    %v868 = vsub.f32 %v569, %v867
    %v869 = vand.u32 %v868, 4294901760
    %870 = vmatmul.mubr.f32.gmra.mxu0 %v869
    %v871 = vpop.f32.mrf.mxu0
    %v872 = vadd.f32 %v798, %v871
    %v873 = vpop.f32.mrf.mxu0
    %874 = vdwg.mxu0
    %875 = vmatprep.subr.mxu0 0.0
    %876 = vmatpush1.msra.mxu0 0.0
    %877 = vmatprep.subr.mxu0 0.0
    %878 = vmatpush1.msra.mxu0 0.0
    %879 = vmatprep.subr.mxu0 0.0
    %880 = vmatpush1.msra.mxu0 0.0
    %881 = vmatprep.subr.mxu0 0.0
    %882 = vmatpush1.msra.mxu0 0.0
    %883 = vmatprep.subr.mxu0 0.0
    %884 = vmatpush1.msra.mxu0 0.0
    %885 = vmatprep.subr.mxu0 0.0
    %886 = vmatpush1.msra.mxu0 0.0
    %887 = vmatprep.subr.mxu0 0.0
    %888 = vmatpush1.msra.mxu0 0.0
    %889 = vmatprep.subr.mxu0 0.0
    %890 = vmatpush1.msra.mxu0 0.0
    %891 = vmatprep.subr.mxu0 0.0
    %892 = vmatpush1.msra.mxu0 0.0
    %893 = vmatprep.subr.mxu0 0.0
    %894 = vmatpush1.msra.mxu0 0.0
    %895 = vmatprep.subr.mxu0 0.0
    %896 = vmatpush1.msra.mxu0 0.0
    %897 = vmatprep.subr.mxu0 0.0
    %898 = vmatpush1.msra.mxu0 0.0
    %899 = vmatprep.subr.mxu0 0.0
    %900 = vmatpush1.msra.mxu0 0.0
    %901 = vmatprep.subr.mxu0 0.0
    %902 = vmatpush1.msra.mxu0 0.0
    %903 = vmatprep.subr.mxu0 0.0
    %904 = vmatpush1.msra.mxu0 0.0
    %905 = vmatprep.subr.mxu0 0.0
    %v906 = vand.u32 %v573, 4294901760
    %v907 = vsub.f32 %v573, %v906
    %v908 = vand.u32 %v907, 4294901760
    %909 = vmatpush1.msra.mxu0 %v908
    %910 = vmatprep.subr.mxu0 0.0
    %911 = vmatpush2.msra.mxu0 0.0
    %912 = vmatprep.subr.mxu0 0.0
    %913 = vmatpush2.msra.mxu0 0.0
    %914 = vmatprep.subr.mxu0 0.0
    %915 = vmatpush2.msra.mxu0 0.0
    %916 = vmatprep.subr.mxu0 0.0
    %917 = vmatpush2.msra.mxu0 0.0
    %918 = vmatprep.subr.mxu0 0.0
    %919 = vmatpush2.msra.mxu0 0.0
    %920 = vmatprep.subr.mxu0 0.0
    %921 = vmatpush2.msra.mxu0 0.0
    %922 = vmatprep.subr.mxu0 0.0
    %923 = vmatpush2.msra.mxu0 0.0
    %924 = vmatprep.subr.mxu0 0.0
    %925 = vmatpush2.msra.mxu0 0.0
    %926 = vmatprep.subr.mxu0 0.0
    %927 = vmatpush2.msra.mxu0 0.0
    %928 = vmatprep.subr.mxu0 0.0
    %929 = vmatpush2.msra.mxu0 0.0
    %930 = vmatprep.subr.mxu0 0.0
    %931 = vmatpush2.msra.mxu0 0.0
    %932 = vmatprep.subr.mxu0 0.0
    %933 = vmatpush2.msra.mxu0 0.0
    %934 = vmatprep.subr.mxu0 0.0
    %935 = vmatpush2.msra.mxu0 0.0
    %936 = vmatprep.subr.mxu0 0.0
    %937 = vmatpush2.msra.mxu0 0.0
    %938 = vmatprep.subr.mxu0 0.0
    %939 = vmatpush2.msra.mxu0 0.0
    %940 = vmatprep.subr.mxu0 0.0
    %941 = vmatpush2.msra.mxu0 0.0
    %942 = vmatprep.mubr.f32.mxu0 0.0
    %v943 = vand.u32 %v569, 4294901760
    %944 = vmatmul.mubr.f32.gmra.mxu0 %v943
    %v945 = vpop.f32.mrf.mxu0
    %v946 = vadd.f32 %v872, %v945
    %v947 = vpop.f32.mrf.mxu0
    %948 = vdwg.mxu0
    %949 = vmatprep.subr.mxu0 0.0
    %950 = vmatpush1.msra.mxu0 0.0
    %951 = vmatprep.subr.mxu0 0.0
    %952 = vmatpush1.msra.mxu0 0.0
    %953 = vmatprep.subr.mxu0 0.0
    %954 = vmatpush1.msra.mxu0 0.0
    %955 = vmatprep.subr.mxu0 0.0
    %956 = vmatpush1.msra.mxu0 0.0
    %957 = vmatprep.subr.mxu0 0.0
    %958 = vmatpush1.msra.mxu0 0.0
    %959 = vmatprep.subr.mxu0 0.0
    %960 = vmatpush1.msra.mxu0 0.0
    %961 = vmatprep.subr.mxu0 0.0
    %962 = vmatpush1.msra.mxu0 0.0
    %963 = vmatprep.subr.mxu0 0.0
    %964 = vmatpush1.msra.mxu0 0.0
    %965 = vmatprep.subr.mxu0 0.0
    %966 = vmatpush1.msra.mxu0 0.0
    %967 = vmatprep.subr.mxu0 0.0
    %968 = vmatpush1.msra.mxu0 0.0
    %969 = vmatprep.subr.mxu0 0.0
    %970 = vmatpush1.msra.mxu0 0.0
    %971 = vmatprep.subr.mxu0 0.0
    %972 = vmatpush1.msra.mxu0 0.0
    %973 = vmatprep.subr.mxu0 0.0
    %974 = vmatpush1.msra.mxu0 0.0
    %975 = vmatprep.subr.mxu0 0.0
    %976 = vmatpush1.msra.mxu0 0.0
    %977 = vmatprep.subr.mxu0 0.0
    %978 = vmatpush1.msra.mxu0 0.0
    %979 = vmatprep.subr.mxu0 0.0
    %v980 = vand.u32 %v573, 4294901760
    %981 = vmatpush1.msra.mxu0 %v980
    %982 = vmatprep.subr.mxu0 0.0
    %983 = vmatpush2.msra.mxu0 0.0
    %984 = vmatprep.subr.mxu0 0.0
    %985 = vmatpush2.msra.mxu0 0.0
    %986 = vmatprep.subr.mxu0 0.0
    %987 = vmatpush2.msra.mxu0 0.0
    %988 = vmatprep.subr.mxu0 0.0
    %989 = vmatpush2.msra.mxu0 0.0
    %990 = vmatprep.subr.mxu0 0.0
    %991 = vmatpush2.msra.mxu0 0.0
    %992 = vmatprep.subr.mxu0 0.0
    %993 = vmatpush2.msra.mxu0 0.0
    %994 = vmatprep.subr.mxu0 0.0
    %995 = vmatpush2.msra.mxu0 0.0
    %996 = vmatprep.subr.mxu0 0.0
    %997 = vmatpush2.msra.mxu0 0.0
    %998 = vmatprep.subr.mxu0 0.0
    %999 = vmatpush2.msra.mxu0 0.0
    %1000 = vmatprep.subr.mxu0 0.0
    %1001 = vmatpush2.msra.mxu0 0.0
    %1002 = vmatprep.subr.mxu0 0.0
    %1003 = vmatpush2.msra.mxu0 0.0
    %1004 = vmatprep.subr.mxu0 0.0
    %1005 = vmatpush2.msra.mxu0 0.0
    %1006 = vmatprep.subr.mxu0 0.0
    %1007 = vmatpush2.msra.mxu0 0.0
    %1008 = vmatprep.subr.mxu0 0.0
    %1009 = vmatpush2.msra.mxu0 0.0
    %1010 = vmatprep.subr.mxu0 0.0
    %1011 = vmatpush2.msra.mxu0 0.0
    %1012 = vmatprep.subr.mxu0 0.0
    %1013 = vmatpush2.msra.mxu0 0.0
    %1014 = vmatprep.mubr.f32.mxu0 0.0
    %v1015 = vand.u32 %v569, 4294901760
    %1016 = vmatmul.mubr.f32.gmra.mxu0 %v1015
    %v1017 = vpop.f32.mrf.mxu0
    %v1018 = vadd.f32 %v946, %v1017
    %v1019 = vpop.f32.mrf.mxu0
    %1020 = vdwg.mxu0
    %v1021 = vadd.f32 %v1018, 3.0
    %v1022 = vmax.f32 %v1021, 0.0
    %v1023 = vmin.f32 %v1022, 6.0
    %v1024 = vmul.f32 %v1023, 0.16666667
    %v1025 = vlaneseq
    %v1026 = vshrl.u32 %v1025, 7
    %v1027 = vsub.s32 0, %v1026
    %v1028 = vrot.slane %v1024, %v1027
    %1030 = vbcast.lane.b32.xlu0 %v1028, 256
    %v1031 = vpop.permute.xlu0 %1030
    %s1033 = sor.u32 256, 8
    %1034 = vbcast.lane.b32.xlu0 %v1028, %s1033
    %v1035 = vpop.permute.xlu0 %1034
    %v1036 = vlaneseq
    %v1037 = vshrl.u32 %v1036, 7
    %v1038 = vsub.s32 1, %v1037
    %v1039 = vrot.slane %v1024, %v1038
    %1041 = vbcast.lane.b32.xlu0 %v1039, 256
    %v1042 = vpop.permute.xlu0 %1041
    %s1044 = sor.u32 256, 8
    %1045 = vbcast.lane.b32.xlu0 %v1039, %s1044
    %v1046 = vpop.permute.xlu0 %1045
    %v1047 = vmul.f32 %v35, %v1031
    %v1048 = vmul.f32 %v36, %v1031
    %v1049 = vmul.f32 %v37, %v1035
    %v1050 = vmul.f32 %v38, %v1035
    %v1051 = vmul.f32 %v39, %v1042
    %v1052 = vmul.f32 %v40, %v1042
    %v1053 = vmul.f32 %v41, %v1046
    %v1054 = vmul.f32 %v42, %v1046
    %1055 = vst [vmem:[#allocation5] sm:$0xff] %v1047
    %1056 = vst [vmem:[#allocation5 + $0x8] sm:$0xff] %v1048
    %1057 = vst [vmem:[#allocation5 + $0x10] sm:$0xff] %v1049
    %1058 = vst [vmem:[#allocation5 + $0x18] sm:$0xff] %v1050
    %1059 = vst [vmem:[#allocation5 + $0x20] sm:$0xff] %v1051
    %1060 = vst [vmem:[#allocation5 + $0x28] sm:$0xff] %v1052
    %1061 = vst [vmem:[#allocation5 + $0x30] sm:$0xff] %v1053
    %1062 = vst [vmem:[#allocation5 + $0x38] sm:$0xff] %v1054
    // Predicated region
    $region26: #{tpu_custom_call.1} parent=1 // pred_check
      _
    $region27: #{tpu_custom_call.1} parent=1 // pred_check_branch
      %1064 = sbr.rel (0) target = $region29
    $region28: #{tpu_custom_call.1} parent=1 // pred_region
      %s1066 = ssub.s32 1024, 1024
      %1067 = vsyncadd [#allocation4], %s1066
      %s1068 = sshll.u32 [#allocation5], 4
      %s1069 = int_to_ptr.vmem [resolvable:$true] %s1068
      %1074 = dma.vmem_to_hbm [thread:$0]  %s1069, 1024, %s5, [#allocation4], 256, 256, 16
    $region29: #{tpu_custom_call.1} parent=1 // pred_fallthru
      _
    // Predicated region
    $region30: #{tpu_custom_call.1} parent=1 // pred_check
      _
    $region31: #{tpu_custom_call.1} parent=1 // pred_check_branch
      %1076 = sbr.rel (0) target = $region33
    $region32: #{tpu_custom_call.1} parent=1 // pred_region
      %1077 = dma.done [#allocation4], 1024
    $region33: #{tpu_custom_call.1} parent=1 // pred_fallthru
      _
    %1078 = vsyncpa [#allocation3], 1
    %1079 = vsyncpa [#allocation4], 1

</llo_original>
